<compile_context>
chip_gen: v5e
topology: v5e:2x2
jax: 0.10.0
libtpu: 0.0.40
codegen_flags: <defaults>
</compile_context>

<pallas_src>
import functools

import jax
import jax.numpy as jnp
from jax.experimental import pallas as pl
from jax.experimental.pallas import tpu as pltpu


def _gres_kernel(x_ref, w_ref, b_ref, o_ref, xs_ref, *, k, wp, mg, c):
    """One grid step = one group of vertically-stacked samples.

    x_ref : (1, C, Sg)    zero-padded, spatially-flattened group block
                          (channels on sublane, flat padded spatial on lane)
    w_ref : (2C, k*k*C)   stacked conv weights, column index = tap*C + c_in
    b_ref : (2C, 1)       conv bias (f32)
    o_ref : (1, C, Mg)    lane-dense output block (incl. discard cols / rows)
    xs_ref: (k*k*C, Mg)   VMEM scratch: stacked ("im2col") matmul operand
    """
    # ---- stage ALL k*k shifted taps first (keeps the lane-shift stitching out
    # of the matmul issue window), then a single MXU dot.
    for t in range(k * k):                       # statically unrolled taps
        dy, dx = divmod(t, k)
        off = dy * wp + dx                       # static lane offset of this tap
        xs_ref[t * c:(t + 1) * c, :] = (
            x_ref[0, :, pl.ds(off, mg)].astype(xs_ref.dtype))

    # ---- one big matmul: (2C, k*k*C) x (k*k*C, Mg), f32 accumulation on MXU.
    z = jnp.dot(w_ref[...], xs_ref[...], preferred_element_type=jnp.float32)
    z = z + b_ref[...]                           # bias broadcast over lanes

    out = z[:c]                                  # GLU split along sublanes
    gate = z[c:]

    # Residual = center-tap slice of the (un-cast) resident input block, so it
    # stays exact even when the matmul operands are bf16.
    center = (k // 2) * wp + (k // 2)
    res = x_ref[0, :, pl.ds(center, mg)].astype(jnp.float32)

    o_ref[0] = (res + out * jax.nn.sigmoid(gate)).astype(o_ref.dtype)


@functools.partial(
    jax.jit,
    static_argnames=("covsiz", "stride", "padding", "compute_dtype", "samples_per_block"))
def gres_block_forward(x_nchw, weight, bias, *, covsiz, stride, padding,
                       compute_dtype=jnp.float32, samples_per_block=None):
    """x_nchw: (N, C, H, W);  weight: (2C, C, k, k) [PyTorch OIHW];  bias: (2C,)."""
    n, c, h, w = x_nchw.shape
    two_c = weight.shape[0]
    assert two_c == 2 * c
    k = covsiz
    # The residual add (and the center-tap residual trick) require a
    # shape-preserving convolution.
    assert stride == 1 and 2 * padding == k - 1, \
        "Gres_block residual needs stride=1, padding=k//2 (shape-preserving conv)"
    p = padding

    wp = w + 2 * p                 # padded row width
    hp = h + 2 * p                 # padded rows per sample
    in_dtype = x_nchw.dtype
    cdt = jnp.dtype(compute_dtype)

    # ---- pick how many samples to fold into one grid step -------------------
    def _step_bytes(nb_):
        sg_ = (nb_ * hp + 1) * wp
        mg_ = ((nb_ - 1) * hp + h) * wp
        return (2 * c * (sg_ + mg_) * jnp.dtype(in_dtype).itemsize   # dbl-buffered in/out
                + k * k * c * mg_ * cdt.itemsize                     # staged operand scratch
                + 2 * c * mg_ * 4)                                    # f32 GLU pre-activation

    if samples_per_block is None:
        nb = max(1, n // 2)        # keep >= 2 grid steps so both v7x TCs get work
        while nb > 1 and _step_bytes(nb) > 24 * 1024 * 1024:
            nb = max(1, nb // 2)
    else:
        nb = max(1, min(int(samples_per_block), n))

    g = -(-n // nb)                # grid steps (groups)
    n_pad = g * nb - n

    sg = (nb * hp + 1) * wp        # padded flat length per group (+1 zero row keeps
                                   #  every tap read of the discard positions in-bounds)
    mg = ((nb - 1) * hp + h) * wp  # output positions per group (incl. discard cols and
                                   #  2p garbage rows between stacked samples)

    # ---- host-side prep: zero-pad, stack nb samples vertically, flatten -----
    xp = jnp.pad(x_nchw, ((0, n_pad), (0, 0), (p, p), (p, p)))       # (g*nb, C, hp, wp)
    xg = xp.reshape(g, nb, c, hp, wp).transpose(0, 2, 1, 3, 4)
    xg = xg.reshape(g, c, nb * hp, wp)
    xg = jnp.pad(xg, ((0, 0), (0, 0), (0, 1), (0, 0)))               # +1 zero row at bottom
    xg_flat = xg.reshape(g, c, sg)                                   # stays in in_dtype (f32)

    # (2C, C, kh, kw) -> (2C, kh, kw, C) -> (2C, k*k*C): col index = tap*C + c_in.
    w_stacked = jnp.transpose(weight, (0, 2, 3, 1)).reshape(two_c, k * k * c).astype(cdt)
    b_col = bias.reshape(two_c, 1).astype(jnp.float32)

    kernel = functools.partial(_gres_kernel, k=k, wp=wp, mg=mg, c=c)

    # Rough scoped-VMEM need; only request a higher limit when the default
    # (16 MiB on v5e / 32 MiB on v6e/v7x) might not cover it.
    vmem_est = _step_bytes(nb) + 2 * (w_stacked.size * cdt.itemsize + two_c * 4)
    vmem_limit = int(min(2 * vmem_est, 48 * 1024 * 1024)) if vmem_est > 14 * 1024 * 1024 else None

    out_flat = pl.pallas_call(
        kernel,
        out_shape=jax.ShapeDtypeStruct((g, c, mg), in_dtype),
        grid_spec=pltpu.PrefetchScalarGridSpec(
            num_scalar_prefetch=0,
            grid=(g,),                                               # one step per group
            in_specs=[
                pl.BlockSpec((1, c, sg), lambda i: (i, 0, 0)),             # padded input
                pl.BlockSpec((two_c, k * k * c), lambda i: (0, 0)),        # weights (resident)
                pl.BlockSpec((two_c, 1), lambda i: (0, 0)),                # bias (resident)
            ],
            out_specs=pl.BlockSpec((1, c, mg), lambda i: (i, 0, 0)),
            scratch_shapes=[pltpu.VMEM((k * k * c, mg), cdt)],             # staged operand
        ),
        compiler_params=pltpu.CompilerParams(
            dimension_semantics=("parallel",),     # groups are independent (v7x: 2 TCs)
            vmem_limit_bytes=vmem_limit,
        ),
    )(xg_flat, w_stacked, b_col)

    # ---- unpack: (g, C, Mg) -> (N, C, H, W); drop discard cols / garbage rows.
    out4 = out_flat.reshape(g, c, (nb - 1) * hp + h, wp)
    if nb == 1:
        out_s = out4[:, :, :, :w].reshape(g, c, 1, h, w)
    else:
        row_idx = (jnp.arange(nb)[:, None] * hp + jnp.arange(h)[None, :]).reshape(-1)
        out_s = jnp.take(out4, row_idx, axis=2)[..., :w].reshape(g, c, nb, h, w)
    out = out_s.transpose(0, 2, 1, 3, 4).reshape(g * nb, c, h, w)
    return out[:n]


def _reference(x_nchw, weight, bias, *, stride, padding):
    """Pure-JAX reference matching torch: Conv2d -> GLU(dim=1) -> residual add."""
    conv = jax.lax.conv_general_dilated(
        x_nchw, weight,
        window_strides=(stride, stride),
        padding=[(padding, padding), (padding, padding)],
        dimension_numbers=("NCHW", "OIHW", "NCHW"),
    ) + bias[None, :, None, None]
    c = x_nchw.shape[1]
    out, gate = conv[:, :c], conv[:, c:]
    return x_nchw + out * jax.nn.sigmoid(gate)


if __name__ == "__main__":
    # Gres_block(covsiz=3, chanal=4, stride=1, padding=1): shape-preserving conv.
    covsiz, chanal, stride, padding = 3, 4, 1, 1
    N, C, H, W = 2, chanal, 16, 16

    key = jax.random.PRNGKey(0)
    kx, kw, kb = jax.random.split(key, 3)
    x = jax.random.normal(kx, (N, C, H, W), dtype=jnp.float32)
    # Deterministic synthetic parameters (shapes per nn.Conv2d(C, 2C, k)).
    fan_in = C * covsiz * covsiz
    weight = jax.random.normal(kw, (2 * C, C, covsiz, covsiz), dtype=jnp.float32) / jnp.sqrt(fan_in)
    bias = 0.01 * jax.random.normal(kb, (2 * C,), dtype=jnp.float32)

    ref = _reference(x, weight, bias, stride=stride, padding=padding)

    # 1) default: f32 operands, one sample per grid step (grid=(2,), both v7x TCs busy)
    out = gres_block_forward(x, weight, bias, covsiz=covsiz, stride=stride, padding=padding)
    out = jax.block_until_ready(out)
    assert out.shape == (N, C, H, W)
    assert jnp.allclose(out, ref, atol=1e-5, rtol=1e-5), float(jnp.max(jnp.abs(out - ref)))

    # 2) batch-folded path: both samples stacked vertically into one grid step
    out2 = gres_block_forward(x, weight, bias, covsiz=covsiz, stride=stride,
                              padding=padding, samples_per_block=2)
    out2 = jax.block_until_ready(out2)
    assert jnp.allclose(out2, ref, atol=1e-5, rtol=1e-5), float(jnp.max(jnp.abs(out2 - ref)))

    # 3) bf16 matmul operands, f32 residual/epilogue (v6e/v7x mode): looser tolerance
    out3 = gres_block_forward(x, weight, bias, covsiz=covsiz, stride=stride,
                              padding=padding, compute_dtype=jnp.bfloat16)
    out3 = jax.block_until_ready(out3)
    assert jnp.allclose(out3, ref, atol=5e-2, rtol=5e-2), float(jnp.max(jnp.abs(out3 - ref)))

    print("KERNEL_OK")
</pallas_src>

<mosaic_0001>
module attributes {stable_mosaic.version = 11 : i64} {
  func.func @_gres_kernel(%arg0: i32, %arg1: memref<1x4x342xf32, #tpu.memory_space<vmem>>, %arg2: memref<8x36xf32, #tpu.memory_space<vmem>>, %arg3: memref<8x1xf32, #tpu.memory_space<vmem>>, %arg4: memref<1x4x288xf32, #tpu.memory_space<vmem>>, %arg5: memref<36x288xf32, #tpu.memory_space<vmem>>) attributes {dimension_semantics = [#tpu.dimension_semantics<parallel>], iteration_bounds = array<i64: 2>, scalar_prefetch = 0 : i64, scratch_operands = 1 : i64, tpu.core_type = #tpu.core_type<tc>, window_params = [{transform_indices = @transform_0, window_bounds = array<i64: 1, 4, 342>}, {pipeline_mode = #tpu.pipeline_mode<synchronous>, transform_indices = @transform_1, window_bounds = array<i64: 8, 36>}, {pipeline_mode = #tpu.pipeline_mode<synchronous>, transform_indices = @transform_2, window_bounds = array<i64: 8, 1>}, {transform_indices = @transform_3, window_bounds = array<i64: 1, 4, 288>}]} {
    %c0 = arith.constant 0 : index
    %c0_0 = arith.constant 0 : index
    %c0_1 = arith.constant 0 : index
    %0 = vector.load %arg1[%c0, %c0_0, %c0_1] : memref<1x4x342xf32, #tpu.memory_space<vmem>>, vector<1x4x288xf32>
    %1 = vector.shape_cast %0 : vector<1x4x288xf32> to vector<4x288xf32>
    %c0_2 = arith.constant 0 : index
    %c0_3 = arith.constant 0 : index
    %2 = vector.load %arg5[%c0_2, %c0_3] : memref<36x288xf32, #tpu.memory_space<vmem>>, vector<4x288xf32>
    tpu.vector_store %arg5[%c0_2, %c0_3], %1 {strides = array<i32>} : memref<36x288xf32, #tpu.memory_space<vmem>>, vector<4x288xf32>,
    %c0_4 = arith.constant 0 : index
    %c0_5 = arith.constant 0 : index
    %c1 = arith.constant 1 : index
    %3 = vector.load %arg1[%c0_4, %c0_5, %c1] : memref<1x4x342xf32, #tpu.memory_space<vmem>>, vector<1x4x288xf32>
    %4 = vector.shape_cast %3 : vector<1x4x288xf32> to vector<4x288xf32>
    %c4 = arith.constant 4 : index
    %c0_6 = arith.constant 0 : index
    %5 = vector.load %arg5[%c4, %c0_6] : memref<36x288xf32, #tpu.memory_space<vmem>>, vector<4x288xf32>
    tpu.vector_store %arg5[%c4, %c0_6], %4 {strides = array<i32>} : memref<36x288xf32, #tpu.memory_space<vmem>>, vector<4x288xf32>,
    %c0_7 = arith.constant 0 : index
    %c0_8 = arith.constant 0 : index
    %c2 = arith.constant 2 : index
    %6 = vector.load %arg1[%c0_7, %c0_8, %c2] : memref<1x4x342xf32, #tpu.memory_space<vmem>>, vector<1x4x288xf32>
    %7 = vector.shape_cast %6 : vector<1x4x288xf32> to vector<4x288xf32>
    %c8 = arith.constant 8 : index
    %c0_9 = arith.constant 0 : index
    %8 = vector.load %arg5[%c8, %c0_9] : memref<36x288xf32, #tpu.memory_space<vmem>>, vector<4x288xf32>
    tpu.vector_store %arg5[%c8, %c0_9], %7 {strides = array<i32>} : memref<36x288xf32, #tpu.memory_space<vmem>>, vector<4x288xf32>,
    %c0_10 = arith.constant 0 : index
    %c0_11 = arith.constant 0 : index
    %c18 = arith.constant 18 : index
    %9 = vector.load %arg1[%c0_10, %c0_11, %c18] : memref<1x4x342xf32, #tpu.memory_space<vmem>>, vector<1x4x288xf32>
    %10 = vector.shape_cast %9 : vector<1x4x288xf32> to vector<4x288xf32>
    %c12 = arith.constant 12 : index
    %c0_12 = arith.constant 0 : index
    %11 = vector.load %arg5[%c12, %c0_12] : memref<36x288xf32, #tpu.memory_space<vmem>>, vector<4x288xf32>
    tpu.vector_store %arg5[%c12, %c0_12], %10 {strides = array<i32>} : memref<36x288xf32, #tpu.memory_space<vmem>>, vector<4x288xf32>,
    %c0_13 = arith.constant 0 : index
    %c0_14 = arith.constant 0 : index
    %c19 = arith.constant 19 : index
    %12 = vector.load %arg1[%c0_13, %c0_14, %c19] : memref<1x4x342xf32, #tpu.memory_space<vmem>>, vector<1x4x288xf32>
    %13 = vector.shape_cast %12 : vector<1x4x288xf32> to vector<4x288xf32>
    %c16 = arith.constant 16 : index
    %c0_15 = arith.constant 0 : index
    %14 = vector.load %arg5[%c16, %c0_15] : memref<36x288xf32, #tpu.memory_space<vmem>>, vector<4x288xf32>
    tpu.vector_store %arg5[%c16, %c0_15], %13 {strides = array<i32>} : memref<36x288xf32, #tpu.memory_space<vmem>>, vector<4x288xf32>,
    %c0_16 = arith.constant 0 : index
    %c0_17 = arith.constant 0 : index
    %c20 = arith.constant 20 : index
    %15 = vector.load %arg1[%c0_16, %c0_17, %c20] : memref<1x4x342xf32, #tpu.memory_space<vmem>>, vector<1x4x288xf32>
    %16 = vector.shape_cast %15 : vector<1x4x288xf32> to vector<4x288xf32>
    %c20_18 = arith.constant 20 : index
    %c0_19 = arith.constant 0 : index
    %17 = vector.load %arg5[%c20_18, %c0_19] : memref<36x288xf32, #tpu.memory_space<vmem>>, vector<4x288xf32>
    tpu.vector_store %arg5[%c20_18, %c0_19], %16 {strides = array<i32>} : memref<36x288xf32, #tpu.memory_space<vmem>>, vector<4x288xf32>,
    %c0_20 = arith.constant 0 : index
    %c0_21 = arith.constant 0 : index
    %c36 = arith.constant 36 : index
    %18 = vector.load %arg1[%c0_20, %c0_21, %c36] : memref<1x4x342xf32, #tpu.memory_space<vmem>>, vector<1x4x288xf32>
    %19 = vector.shape_cast %18 : vector<1x4x288xf32> to vector<4x288xf32>
    %c24 = arith.constant 24 : index
    %c0_22 = arith.constant 0 : index
    %20 = vector.load %arg5[%c24, %c0_22] : memref<36x288xf32, #tpu.memory_space<vmem>>, vector<4x288xf32>
    tpu.vector_store %arg5[%c24, %c0_22], %19 {strides = array<i32>} : memref<36x288xf32, #tpu.memory_space<vmem>>, vector<4x288xf32>,
    %c0_23 = arith.constant 0 : index
    %c0_24 = arith.constant 0 : index
    %c37 = arith.constant 37 : index
    %21 = vector.load %arg1[%c0_23, %c0_24, %c37] : memref<1x4x342xf32, #tpu.memory_space<vmem>>, vector<1x4x288xf32>
    %22 = vector.shape_cast %21 : vector<1x4x288xf32> to vector<4x288xf32>
    %c28 = arith.constant 28 : index
    %c0_25 = arith.constant 0 : index
    %23 = vector.load %arg5[%c28, %c0_25] : memref<36x288xf32, #tpu.memory_space<vmem>>, vector<4x288xf32>
    tpu.vector_store %arg5[%c28, %c0_25], %22 {strides = array<i32>} : memref<36x288xf32, #tpu.memory_space<vmem>>, vector<4x288xf32>,
    %c0_26 = arith.constant 0 : index
    %c0_27 = arith.constant 0 : index
    %c38 = arith.constant 38 : index
    %24 = vector.load %arg1[%c0_26, %c0_27, %c38] : memref<1x4x342xf32, #tpu.memory_space<vmem>>, vector<1x4x288xf32>
    %25 = vector.shape_cast %24 : vector<1x4x288xf32> to vector<4x288xf32>
    %c32 = arith.constant 32 : index
    %c0_28 = arith.constant 0 : index
    %26 = vector.load %arg5[%c32, %c0_28] : memref<36x288xf32, #tpu.memory_space<vmem>>, vector<4x288xf32>
    tpu.vector_store %arg5[%c32, %c0_28], %25 {strides = array<i32>} : memref<36x288xf32, #tpu.memory_space<vmem>>, vector<4x288xf32>,
    %c0_29 = arith.constant 0 : index
    %c0_30 = arith.constant 0 : index
    %27 = vector.load %arg2[%c0_29, %c0_30] : memref<8x36xf32, #tpu.memory_space<vmem>>, vector<8x36xf32>
    %c0_31 = arith.constant 0 : index
    %c0_32 = arith.constant 0 : index
    %28 = vector.load %arg5[%c0_31, %c0_32] : memref<36x288xf32, #tpu.memory_space<vmem>>, vector<36x288xf32>
    %cst = arith.constant dense<0.000000e+00> : vector<8x288xf32>
    %29 = tpu.matmul %27, %28, %cst {dimension_numbers = #tpu.dot_dimension_numbers<[1], [0], [0], [1], [0, 0, 1, 1], [], []>} : vector<8x36xf32>, vector<36x288xf32>, vector<8x288xf32> -> vector<8x288xf32>
    %c0_33 = arith.constant 0 : index
    %c0_34 = arith.constant 0 : index
    %30 = vector.load %arg3[%c0_33, %c0_34] : memref<8x1xf32, #tpu.memory_space<vmem>>, vector<8x1xf32>
    %31 = vector.broadcast %30 : vector<8x1xf32> to vector<8x288xf32>
    %32 = arith.addf %29, %31 : vector<8x288xf32>
    %33 = vector.extract_strided_slice %32 {offsets = [0, 0], sizes = [4, 288], strides = [1, 1]} : vector<8x288xf32> to vector<4x288xf32>
    %34 = vector.extract_strided_slice %32 {offsets = [4, 0], sizes = [4, 288], strides = [1, 1]} : vector<8x288xf32> to vector<4x288xf32>
    %c0_35 = arith.constant 0 : index
    %c0_36 = arith.constant 0 : index
    %c19_37 = arith.constant 19 : index
    %35 = vector.load %arg1[%c0_35, %c0_36, %c19_37] : memref<1x4x342xf32, #tpu.memory_space<vmem>>, vector<1x4x288xf32>
    %36 = vector.shape_cast %35 : vector<1x4x288xf32> to vector<4x288xf32>
    %37 = arith.negf %34 : vector<4x288xf32>
    %38 = math.exp %37 : vector<4x288xf32>
    %cst_38 = arith.constant 1.000000e+00 : f32
    %39 = vector.broadcast %cst_38 : f32 to vector<4x288xf32>
    %40 = arith.addf %39, %38 : vector<4x288xf32>
    %41 = arith.divf %39, %40 : vector<4x288xf32>
    %42 = arith.mulf %33, %41 : vector<4x288xf32>
    %43 = arith.addf %36, %42 : vector<4x288xf32>
    %c0_39 = arith.constant 0 : index
    %c0_40 = arith.constant 0 : index
    %c0_41 = arith.constant 0 : index
    %44 = vector.load %arg4[%c0_39, %c0_40, %c0_41] : memref<1x4x288xf32, #tpu.memory_space<vmem>>, vector<1x4x288xf32>
    %45 = vector.shape_cast %44 : vector<1x4x288xf32> to vector<4x288xf32>
    %46 = vector.shape_cast %43 : vector<4x288xf32> to vector<1x4x288xf32>
    tpu.vector_store %arg4[%c0_39, %c0_40, %c0_41], %46 {strides = array<i32>} : memref<1x4x288xf32, #tpu.memory_space<vmem>>, vector<1x4x288xf32>,
    return
  }
  func.func @transform_0(%arg0: i32) -> (i32, i32, i32) {
    %c0_i32 = arith.constant 0 : i32
    %c0_i32_0 = arith.constant 0 : i32
    %c0_i32_1 = arith.constant 0 : i32
    return %arg0, %c0_i32, %c0_i32_0 : i32, i32, i32
  }
  func.func @transform_1(%arg0: i32) -> (i32, i32) {
    %c0_i32 = arith.constant 0 : i32
    %c0_i32_0 = arith.constant 0 : i32
    %c0_i32_1 = arith.constant 0 : i32
    return %c0_i32, %c0_i32_0 : i32, i32
  }
  func.func @transform_2(%arg0: i32) -> (i32, i32) {
    %c0_i32 = arith.constant 0 : i32
    %c0_i32_0 = arith.constant 0 : i32
    %c0_i32_1 = arith.constant 0 : i32
    return %c0_i32, %c0_i32_0 : i32, i32
  }
  func.func @transform_3(%arg0: i32) -> (i32, i32, i32) {
    %c0_i32 = arith.constant 0 : i32
    %c0_i32_0 = arith.constant 0 : i32
    %c0_i32_1 = arith.constant 0 : i32
    return %arg0, %c0_i32, %c0_i32_0 : i32, i32, i32
  }
}

</mosaic_0001>

<llo_original>
// kernel: gres_block_forward.1
$region0: #{gres_block_forward.1}
  #allocation0 [shape = 'u32[]', space=smem, size = 0x4, offset = 0x4, fixed_abs, tag = 'smem constant byte address 0x4 - core index']
  #allocation1 [shape = 'u32[72,128]{1,0:T(1,128)}', space=vmem, size = 0x9000, scoped, tag = 'internal scratch']
  #allocation2 [shape = 'f32[36,288]{1,0:T(8,128)}', space=vmem, size = 0xf000, scoped, tag = 'scratch operand']
  %s0 = inlined_call_operand.vmem [shape: f32[2,4,342], index: 0, kind: input, shape index: {}]
  %s1 = inlined_call_operand.vmem [shape: f32[8,36], index: 1, kind: input, shape index: {}]
  %s2 = inlined_call_operand.vmem [shape: f32[8,1], index: 2, kind: input, shape index: {}]
  %s3 = inlined_call_operand.vmem [shape: f32[2,4,288], index: 3, kind: output, shape index: {}]
  %s4 = sld [smem:[#allocation0]]
  $region45: #{gres_block_forward.1} parent=0
    _
  %s6 = ssub.s32 1, %s4
  %s7 = scalar_select 0, %s6, %s4
  loop: start=0, step=1, limit=4
  $region2: #{gres_block_forward.1} parent=0 // loop_pre_header
    _
  $region3: #{gres_block_forward.1} parent=0 // loop_header
    %s9 = sphi 0, %s13
    %p10 = scmp.ge.s32.totalorder %s9, 4
    %s19 = sphi 0, %s21
    %s22 = sphi 0, %s19
    %s23 = sphi 0, %s22
    %s39 = sphi 0, %s23
    %s43 = sphi 0, %s43
    %s45 = sphi 0, %s43
    %s46 = sphi 0, %s45
    %s60 = sphi 0, %s46
    %s64 = sphi 0, %s64
    %s66 = sphi 0, %s64
    %s67 = sphi 0, %s66
    %s81 = sphi 0, %s67
    %s87 = sphi 0, %s89
    %s90 = sphi 0, %s87
    %s91 = sphi 0, %s90
    %s107 = sphi 0, %s91
  $region4: #{gres_block_forward.1} parent=0 // loop_header_branch
    %12 = sbr.rel (%p10) target = $region8
  $region5: #{gres_block_forward.1} parent=0 // loop_body
    %s14 = ssub.s32 %s9, 1
    %s15 = ssub.s32 %s9, 2
    %s16 = sadd.s32 %s9, 1
    %s17 = ssub.s32 %s9, %s16
    %p18 = scmp.eq.s32.totalorder %s17, 0
    %s20 = sadd.s32 %s19, 1
    %s21 = scalar_select %p18, %s19, %s20
    %p24 = pneg %p18
    %p25 = scmp.eq.s32.totalorder %s9, 1
    %p26 = por %p24, %p25
    %p27 = scmp.ne.s32.totalorder %s19, %s22
    %p28 = scmp.eq.s32.totalorder %s9, 0
    %p29 = por %p27, %p28
    %p30 = scmp.ne.s32.totalorder %s19, %s22
    %p31 = scmp.eq.s32.totalorder %s14, 1
    %p32 = por %p30, %p31
    %p33 = scmp.ne.s32.totalorder %s22, %s23
    %p34 = scmp.eq.s32.totalorder %s14, 0
    %p35 = por %p33, %p34
    %p36 = scmp.ne.s32.totalorder %s22, %s23
    %p37 = scmp.eq.s32.totalorder %s15, 1
    %p38 = por %p36, %p37
    %p40 = scmp.ne.s32.totalorder %s23, %s39
    %p41 = scmp.eq.s32.totalorder %s15, 0
    %p42 = por %p40, %p41
    %s44 = sadd.s32 %s43, 1
    %p47 = scmp.eq.s32.totalorder %s9, 1
    %p48 = scmp.ne.s32.totalorder %s43, %s45
    %p49 = scmp.eq.s32.totalorder %s9, 0
    %p50 = por %p48, %p49
    %p51 = scmp.ne.s32.totalorder %s43, %s45
    %p52 = scmp.eq.s32.totalorder %s14, 1
    %p53 = por %p51, %p52
    %p54 = scmp.ne.s32.totalorder %s45, %s46
    %p55 = scmp.eq.s32.totalorder %s14, 0
    %p56 = por %p54, %p55
    %p57 = scmp.ne.s32.totalorder %s45, %s46
    %p58 = scmp.eq.s32.totalorder %s15, 1
    %p59 = por %p57, %p58
    %p61 = scmp.ne.s32.totalorder %s46, %s60
    %p62 = scmp.eq.s32.totalorder %s15, 0
    %p63 = por %p61, %p62
    %s65 = sadd.s32 %s64, 1
    %p68 = scmp.eq.s32.totalorder %s9, 1
    %p69 = scmp.ne.s32.totalorder %s64, %s66
    %p70 = scmp.eq.s32.totalorder %s9, 0
    %p71 = por %p69, %p70
    %p72 = scmp.ne.s32.totalorder %s64, %s66
    %p73 = scmp.eq.s32.totalorder %s14, 1
    %p74 = por %p72, %p73
    %p75 = scmp.ne.s32.totalorder %s66, %s67
    %p76 = scmp.eq.s32.totalorder %s14, 0
    %p77 = por %p75, %p76
    %p78 = scmp.ne.s32.totalorder %s66, %s67
    %p79 = scmp.eq.s32.totalorder %s15, 1
    %p80 = por %p78, %p79
    %p82 = scmp.ne.s32.totalorder %s67, %s81
    %p83 = scmp.eq.s32.totalorder %s15, 0
    %p84 = por %p82, %p83
    %s85 = ssub.s32 %s9, %s16
    %p86 = scmp.eq.s32.totalorder %s85, 0
    %s88 = sadd.s32 %s87, 1
    %s89 = scalar_select %p86, %s87, %s88
    %p92 = pneg %p86
    %p93 = scmp.eq.s32.totalorder %s9, 1
    %p94 = por %p92, %p93
    %p95 = scmp.ne.s32.totalorder %s87, %s90
    %p96 = scmp.eq.s32.totalorder %s9, 0
    %p97 = por %p95, %p96
    %p98 = scmp.ne.s32.totalorder %s87, %s90
    %p99 = scmp.eq.s32.totalorder %s14, 1
    %p100 = por %p98, %p99
    %p101 = scmp.ne.s32.totalorder %s90, %s91
    %p102 = scmp.eq.s32.totalorder %s14, 0
    %p103 = por %p101, %p102
    %p104 = scmp.ne.s32.totalorder %s90, %s91
    %p105 = scmp.eq.s32.totalorder %s15, 1
    %p106 = por %p104, %p105
    %p108 = scmp.ne.s32.totalorder %s91, %s107
    %p109 = scmp.eq.s32.totalorder %s15, 0
    %p110 = por %p108, %p109
    %p111 = scmp.le.s32.totalorder 1, %s9
    %p112 = scmp.lt.s32.totalorder %s9, 3
    %p113 = pnand %p111, %p112
    %p114 = pneg %p113
    // Predicated region
    $region9: #{gres_block_forward.1} parent=5 // pred_check
      _
    $region10: #{gres_block_forward.1} parent=5 // pred_check_branch
      %116 = sbr.rel (%p113) target = $region12
    $region11: #{gres_block_forward.1} parent=5 // pred_region
      %s117 = ssub.s32 %s9, 1
      // Predicated region
      $region13: #{gres_block_forward.1} parent=11 // pred_check
        %p118 = pneg %p56
      $region14: #{gres_block_forward.1} parent=11 // pred_check_branch
        %120 = sbr.rel (%p118) target = $region16
      $region15: #{gres_block_forward.1} parent=11 // pred_region
        _
      $region16: #{gres_block_forward.1} parent=11 // pred_fallthru
        _
      // Predicated region
      $region17: #{gres_block_forward.1} parent=11 // pred_check
        %p121 = pneg %p77
      $region18: #{gres_block_forward.1} parent=11 // pred_check_branch
        %123 = sbr.rel (%p121) target = $region20
      $region19: #{gres_block_forward.1} parent=11 // pred_region
        _
      $region20: #{gres_block_forward.1} parent=11 // pred_fallthru
        _
    $region12: #{gres_block_forward.1} parent=5 // pred_fallthru
      _
    %p124 = scmp.lt.s32.totalorder %s9, 2
    // Predicated region
    $region21: #{gres_block_forward.1} parent=5 // pred_check
      %p125 = pneg %p124
    $region22: #{gres_block_forward.1} parent=5 // pred_check_branch
      %127 = sbr.rel (%p125) target = $region24
    $region23: #{gres_block_forward.1} parent=5 // pred_region
      // Predicated region
      $region25: #{gres_block_forward.1} parent=23 // pred_check
        %p128 = pneg %p29
      $region26: #{gres_block_forward.1} parent=23 // pred_check_branch
        %130 = sbr.rel (%p128) target = $region28
      $region27: #{gres_block_forward.1} parent=23 // pred_region
        %p131 = scmp.lt.s32.totalorder %s9, 1
        %s132 = scalar_select %p131, %s9, 1
        %s133 = smul.addr %s132, 3
        %s134 = smul.addr %s133, 4
        %s135 = scalar_lea.vmem %s0, %s134
      $region28: #{gres_block_forward.1} parent=23 // pred_fallthru
        _
    $region24: #{gres_block_forward.1} parent=5 // pred_fallthru
      _
    %p136 = scmp.le.s32.totalorder 1, %s9
    %p137 = scmp.lt.s32.totalorder %s9, 3
    %p138 = pnand %p136, %p137
    %p139 = pneg %p138
    // Predicated region
    $region29: #{gres_block_forward.1} parent=5 // pred_check
      _
    $region30: #{gres_block_forward.1} parent=5 // pred_check_branch
      %141 = sbr.rel (%p138) target = $region32
    $region31: #{gres_block_forward.1} parent=5 // pred_region
      %s142 = ssub.s32 %s9, 1
      %p143 = scmp.lt.s32.totalorder %s14, 1
      %s144 = scalar_select %p143, %s14, 1
      %s145 = smul.addr %s144, 3
      %s146 = smul.addr %s145, 4
      %s147 = scalar_lea.vmem %s0, %s146
      %p148 = pneg %p35
      %p149 = pneg %p32
      %p150 = pneg %p56
      %p151 = pneg %p53
      %p152 = pneg %p77
      %p153 = pneg %p74
      %p154 = pneg %p103
      %p155 = pneg %p100
      %p156 = scmp.lt.s32.totalorder %s14, 1
      %s157 = scalar_select %p156, %s14, 1
      %s158 = smul.addr %s157, 3
      %s159 = smul.addr %s158, 4
      %s160 = scalar_lea.vmem %s3, %s159
      %p161 = scmp.lt.s32.totalorder %s14, 1
      %s162 = scalar_select %p161, %s14, 1
      %s163 = smul.addr %s162, 3
      %s164 = smul.addr %s163, 4
      %s165 = scalar_lea.vmem %s0, %s164
      %p166 = scmp.lt.s32.totalorder %s14, 1
      %s167 = scalar_select %p166, %s14, 1
      %s168 = smul.addr %s167, 3
      %s169 = smul.addr %s168, 4
      %s170 = scalar_lea.vmem %s3, %s169
      %v171 = vld [vmem:[%s165] sm:$0xff]
      %v172 = vld [vmem:[%s165 + $0x8] sm:$0xf]
      %175 = vst [vmem:[#allocation1] ss:$2 sm:$0xff] %v171
      %s176 = scalar_lea.vmem [#allocation1], 16
      %177 = vst [vmem:[%s176] ss:$2 sm:$0xff] %v172
      %v178 = vld.sshfl [vmem:[#allocation1] sm:$0xff pattern:$0x75316420]
      %v179 = vld.sshfl [vmem:[#allocation1 + $0x8] sm:$0xff pattern:$0x75316420]
      %v180 = vld.sshfl [vmem:[#allocation1 + $0x10] sm:$0xff pattern:$0x75316420]
      %184 = vst [vmem:[#allocation2] sm:$0xf] %v178
      %185 = vst [vmem:[#allocation2 + $0x8] sm:$0xf] %v179
      %vm186 = vcmask 257024
      %187 = vst.msk [vmem:[#allocation2 + $0x10] sm:$0xf] %vm186, %v180
      %v188 = vld [vmem:[%s165] sm:$0xff]
      %v189 = vld [vmem:[%s165 + $0x8] sm:$0xf]
      %s192 = scalar_lea.vmem [#allocation1], 1
      %193 = vst [vmem:[%s192] ss:$2 sm:$0xff] %v188
      %s194 = scalar_lea.vmem [#allocation1], 17
      %195 = vst [vmem:[%s194] ss:$2 sm:$0xff] %v189
      %v196 = vld.sshfl [vmem:[#allocation1] sm:$0xff pattern:$0x75316420]
      %v197 = vld.sshfl [vmem:[#allocation1 + $0x8] sm:$0xff pattern:$0x75316420]
      %v198 = vld.sshfl [vmem:[#allocation1 + $0x10] sm:$0xff pattern:$0x75316420]
      %199 = vrot.lane.b32.xlu0 %v196, 127
      %v200 = vpop.permute.xlu0 %199
      %201 = vrot.lane.b32.xlu0 %v197, 127
      %v202 = vpop.permute.xlu0 %201
      %203 = vrot.lane.b32.xlu0 %v198, 127
      %v204 = vpop.permute.xlu0 %203
      %vm205 = vcmask 1039360
      %v206 = vsel %vm205, %v200, %v202
      %v207 = vsel %vm205, %v202, %v204
      %211 = vst [vmem:[#allocation2] sm:$0xf0] %v206
      %212 = vst [vmem:[#allocation2 + $0x8] sm:$0xf0] %v207
      %vm213 = vcmask 261124
      %214 = vst.msk [vmem:[#allocation2 + $0x10] sm:$0xf0] %vm213, %v204
      %v215 = vld [vmem:[%s165] sm:$0xff]
      %v216 = vld [vmem:[%s165 + $0x8] sm:$0xf]
      %219 = vst [vmem:[#allocation1] ss:$2 sm:$0xff] %v215
      %s220 = scalar_lea.vmem [#allocation1], 16
      %221 = vst [vmem:[%s220] ss:$2 sm:$0xff] %v216
      %v222 = vld.sshfl [vmem:[#allocation1] sm:$0xff pattern:$0x75316420]
      %v223 = vld.sshfl [vmem:[#allocation1 + $0x8] sm:$0xff pattern:$0x75316420]
      %v224 = vld.sshfl [vmem:[#allocation1 + $0x10] sm:$0xff pattern:$0x75316420]
      %225 = vrot.lane.b32.xlu0 %v222, 126
      %v226 = vpop.permute.xlu0 %225
      %227 = vrot.lane.b32.xlu0 %v223, 126
      %v228 = vpop.permute.xlu0 %227
      %229 = vrot.lane.b32.xlu0 %v224, 126
      %v230 = vpop.permute.xlu0 %229
      %vm231 = vcmask 1031168
      %v232 = vsel %vm231, %v226, %v228
      %v233 = vsel %vm231, %v228, %v230
      %237 = vst [vmem:[#allocation2 + $0x18] sm:$0xf] %v232
      %238 = vst [vmem:[#allocation2 + $0x20] sm:$0xf] %v233
      %239 = vst.msk [vmem:[#allocation2 + $0x28] sm:$0xf] %vm186, %v230
      %v240 = vld [vmem:[%s165] sm:$0xff]
      %v241 = vld [vmem:[%s165 + $0x8] sm:$0xf]
      %s244 = scalar_lea.vmem [#allocation1], 1
      %245 = vst [vmem:[%s244] ss:$2 sm:$0xff] %v240
      %s246 = scalar_lea.vmem [#allocation1], 17
      %247 = vst [vmem:[%s246] ss:$2 sm:$0xff] %v241
      %v248 = vld.sshfl [vmem:[#allocation1] sm:$0xff pattern:$0x75316420]
      %v249 = vld.sshfl [vmem:[#allocation1 + $0x8] sm:$0xff pattern:$0x75316420]
      %v250 = vld.sshfl [vmem:[#allocation1 + $0x10] sm:$0xff pattern:$0x75316420]
      %251 = vrot.lane.b32.xlu0 %v248, 110
      %v252 = vpop.permute.xlu0 %251
      %253 = vrot.lane.b32.xlu0 %v249, 110
      %v254 = vpop.permute.xlu0 %253
      %255 = vrot.lane.b32.xlu0 %v250, 110
      %v256 = vpop.permute.xlu0 %255
      %vm257 = vcmask 900096
      %v258 = vsel %vm257, %v252, %v254
      %v259 = vsel %vm257, %v254, %v256
      %263 = vst [vmem:[#allocation2 + $0x18] sm:$0xf0] %v258
      %264 = vst [vmem:[#allocation2 + $0x20] sm:$0xf0] %v259
      %265 = vst.msk [vmem:[#allocation2 + $0x28] sm:$0xf0] %vm213, %v256
      %v266 = vld [vmem:[%s165] sm:$0xff]
      %v267 = vld [vmem:[%s165 + $0x8] sm:$0xf]
      %270 = vst [vmem:[#allocation1] ss:$2 sm:$0xff] %v266
      %s271 = scalar_lea.vmem [#allocation1], 16
      %272 = vst [vmem:[%s271] ss:$2 sm:$0xff] %v267
      %v273 = vld.sshfl [vmem:[#allocation1] sm:$0xff pattern:$0x75316420]
      %v274 = vld.sshfl [vmem:[#allocation1 + $0x8] sm:$0xff pattern:$0x75316420]
      %v275 = vld.sshfl [vmem:[#allocation1 + $0x10] sm:$0xff pattern:$0x75316420]
      %276 = vrot.lane.b32.xlu0 %v273, 109
      %v277 = vpop.permute.xlu0 %276
      %278 = vrot.lane.b32.xlu0 %v274, 109
      %v279 = vpop.permute.xlu0 %278
      %280 = vrot.lane.b32.xlu0 %v275, 109
      %v281 = vpop.permute.xlu0 %280
      %vm282 = vcmask 891904
      %v283 = vsel %vm282, %v277, %v279
      %v284 = vsel %vm282, %v279, %v281
      %288 = vst [vmem:[#allocation2 + $0x30] sm:$0xf] %v283
      %289 = vst [vmem:[#allocation2 + $0x38] sm:$0xf] %v284
      %290 = vst.msk [vmem:[#allocation2 + $0x40] sm:$0xf] %vm186, %v281
      %v291 = vld [vmem:[%s165] sm:$0xff]
      %v292 = vld [vmem:[%s165 + $0x8] sm:$0xf]
      %s295 = scalar_lea.vmem [#allocation1], 1
      %296 = vst [vmem:[%s295] ss:$2 sm:$0xff] %v291
      %s297 = scalar_lea.vmem [#allocation1], 17
      %298 = vst [vmem:[%s297] ss:$2 sm:$0xff] %v292
      %v299 = vld.sshfl [vmem:[#allocation1] sm:$0xff pattern:$0x75316420]
      %v300 = vld.sshfl [vmem:[#allocation1 + $0x8] sm:$0xff pattern:$0x75316420]
      %v301 = vld.sshfl [vmem:[#allocation1 + $0x10] sm:$0xff pattern:$0x75316420]
      %302 = vrot.lane.b32.xlu0 %v299, 108
      %v303 = vpop.permute.xlu0 %302
      %304 = vrot.lane.b32.xlu0 %v300, 108
      %v305 = vpop.permute.xlu0 %304
      %306 = vrot.lane.b32.xlu0 %v301, 108
      %v307 = vpop.permute.xlu0 %306
      %vm308 = vcmask 883712
      %v309 = vsel %vm308, %v303, %v305
      %v310 = vsel %vm308, %v305, %v307
      %314 = vst [vmem:[#allocation2 + $0x30] sm:$0xf0] %v309
      %315 = vst [vmem:[#allocation2 + $0x38] sm:$0xf0] %v310
      %316 = vst.msk [vmem:[#allocation2 + $0x40] sm:$0xf0] %vm213, %v307
      %v317 = vld [vmem:[%s165] sm:$0xff]
      %v318 = vld [vmem:[%s165 + $0x8] sm:$0xf]
      %321 = vst [vmem:[#allocation1] ss:$2 sm:$0xff] %v317
      %s322 = scalar_lea.vmem [#allocation1], 16
      %323 = vst [vmem:[%s322] ss:$2 sm:$0xff] %v318
      %v324 = vld.sshfl [vmem:[#allocation1] sm:$0xff pattern:$0x75316420]
      %v325 = vld.sshfl [vmem:[#allocation1 + $0x8] sm:$0xff pattern:$0x75316420]
      %v326 = vld.sshfl [vmem:[#allocation1 + $0x10] sm:$0xff pattern:$0x75316420]
      %327 = vrot.lane.b32.xlu0 %v324, 92
      %v328 = vpop.permute.xlu0 %327
      %329 = vrot.lane.b32.xlu0 %v325, 92
      %v330 = vpop.permute.xlu0 %329
      %331 = vrot.lane.b32.xlu0 %v326, 92
      %v332 = vpop.permute.xlu0 %331
      %vm333 = vcmask 752640
      %v334 = vsel %vm333, %v328, %v330
      %v335 = vsel %vm333, %v330, %v332
      %339 = vst [vmem:[#allocation2 + $0x48] sm:$0xf] %v334
      %340 = vst [vmem:[#allocation2 + $0x50] sm:$0xf] %v335
      %341 = vst.msk [vmem:[#allocation2 + $0x58] sm:$0xf] %vm186, %v332
      %v342 = vld [vmem:[%s165] sm:$0xff]
      %v343 = vld [vmem:[%s165 + $0x8] sm:$0xf]
      %s346 = scalar_lea.vmem [#allocation1], 1
      %347 = vst [vmem:[%s346] ss:$2 sm:$0xff] %v342
      %s348 = scalar_lea.vmem [#allocation1], 17
      %349 = vst [vmem:[%s348] ss:$2 sm:$0xff] %v343
      %v350 = vld.sshfl [vmem:[#allocation1] sm:$0xff pattern:$0x75316420]
      %v351 = vld.sshfl [vmem:[#allocation1 + $0x8] sm:$0xff pattern:$0x75316420]
      %v352 = vld.sshfl [vmem:[#allocation1 + $0x10] sm:$0xff pattern:$0x75316420]
      %353 = vrot.lane.b32.xlu0 %v350, 91
      %v354 = vpop.permute.xlu0 %353
      %355 = vrot.lane.b32.xlu0 %v351, 91
      %v356 = vpop.permute.xlu0 %355
      %357 = vrot.lane.b32.xlu0 %v352, 91
      %v358 = vpop.permute.xlu0 %357
      %vm359 = vcmask 744448
      %v360 = vsel %vm359, %v354, %v356
      %v361 = vsel %vm359, %v356, %v358
      %365 = vst [vmem:[#allocation2 + $0x48] sm:$0xf0] %v360
      %366 = vst [vmem:[#allocation2 + $0x50] sm:$0xf0] %v361
      %367 = vst.msk [vmem:[#allocation2 + $0x58] sm:$0xf0] %vm213, %v358
      %v368 = vld [vmem:[%s165] sm:$0xff]
      %v369 = vld [vmem:[%s165 + $0x8] sm:$0xf]
      %372 = vst [vmem:[#allocation1] ss:$2 sm:$0xff] %v368
      %s373 = scalar_lea.vmem [#allocation1], 16
      %374 = vst [vmem:[%s373] ss:$2 sm:$0xff] %v369
      %v375 = vld.sshfl [vmem:[#allocation1] sm:$0xff pattern:$0x75316420]
      %v376 = vld.sshfl [vmem:[#allocation1 + $0x8] sm:$0xff pattern:$0x75316420]
      %v377 = vld.sshfl [vmem:[#allocation1 + $0x10] sm:$0xff pattern:$0x75316420]
      %378 = vrot.lane.b32.xlu0 %v375, 90
      %v379 = vpop.permute.xlu0 %378
      %380 = vrot.lane.b32.xlu0 %v376, 90
      %v381 = vpop.permute.xlu0 %380
      %382 = vrot.lane.b32.xlu0 %v377, 90
      %v383 = vpop.permute.xlu0 %382
      %vm384 = vcmask 736256
      %v385 = vsel %vm384, %v379, %v381
      %v386 = vsel %vm384, %v381, %v383
      %390 = vst [vmem:[#allocation2 + $0x60] sm:$0xf] %v385
      %391 = vst [vmem:[#allocation2 + $0x68] sm:$0xf] %v386
      %392 = vst.msk [vmem:[#allocation2 + $0x70] sm:$0xf] %vm186, %v383
      %v393 = vld [vmem:[%s1] sm:$0xff]
      %v394 = vld [vmem:[#allocation2] sm:$0xff]
      %v395 = vld [vmem:[#allocation2 + $0x8] sm:$0xff]
      %v396 = vld [vmem:[#allocation2 + $0x10] sm:$0xff]
      %v397 = vld [vmem:[#allocation2 + $0x18] sm:$0xff]
      %v398 = vld [vmem:[#allocation2 + $0x20] sm:$0xff]
      %v399 = vld [vmem:[#allocation2 + $0x28] sm:$0xff]
      %v400 = vld [vmem:[#allocation2 + $0x30] sm:$0xff]
      %v401 = vld [vmem:[#allocation2 + $0x38] sm:$0xff]
      %v402 = vld [vmem:[#allocation2 + $0x40] sm:$0xff]
      %v403 = vld [vmem:[#allocation2 + $0x48] sm:$0xff]
      %v404 = vld [vmem:[#allocation2 + $0x50] sm:$0xff]
      %v405 = vld [vmem:[#allocation2 + $0x58] sm:$0xff]
      %v406 = vld [vmem:[#allocation2 + $0x60] sm:$0xf]
      %v407 = vld [vmem:[#allocation2 + $0x68] sm:$0xf]
      %v408 = vld [vmem:[#allocation2 + $0x70] sm:$0xf]
      %v409 = vld [vmem:[%s2] sm:$0xff]
      %411 = vset.pattern.permute.xlu0 0
      %412 = vperm.xlu0 %411, %v409
      %v413 = vpop.permute.xlu0 %412
      %vm415 = vcmask 293888
      %v417 = vsel %vm415, %v393, 0
      %vm419 = vcmask 1043456
      %v421 = vsel %vm419, %v406, 0
      %v424 = vsel %vm419, %v407, 0
      %v427 = vsel %vm419, %v408, 0
      %429 = vmatpush.msra.mxu0 0.0
      %430 = vmatpush.msra.mxu0 0.0
      %431 = vmatpush.msra.mxu0 0.0
      %432 = vmatpush.msra.mxu0 0.0
      %433 = vmatpush.msra.mxu0 0.0
      %434 = vmatpush.msra.mxu0 0.0
      %435 = vmatpush.msra.mxu0 0.0
      %436 = vmatpush.msra.mxu0 0.0
      %437 = vmatpush.msra.mxu0 0.0
      %438 = vmatpush.msra.mxu0 0.0
      %439 = vmatpush.msra.mxu0 0.0
      %440 = vmatpush.msra.mxu0 %v421
      %441 = vmatpush.msra.mxu0 %v403
      %442 = vmatpush.msra.mxu0 %v400
      %443 = vmatpush.msra.mxu0 %v397
      %444 = vmatpush.msra.mxu0 %v394
      %445 = vmatmul.f32.gmra.mxu0 %v417
      %v446 = vpop.f32.mrf.mxu0
      %v447 = vadd.f32 %v413, %v446
      %448 = vdwg.mxu0
      %449 = vmatpush.msra.mxu0 0.0
      %450 = vmatpush.msra.mxu0 0.0
      %451 = vmatpush.msra.mxu0 0.0
      %452 = vmatpush.msra.mxu0 0.0
      %453 = vmatpush.msra.mxu0 0.0
      %454 = vmatpush.msra.mxu0 0.0
      %455 = vmatpush.msra.mxu0 0.0
      %456 = vmatpush.msra.mxu0 0.0
      %457 = vmatpush.msra.mxu0 0.0
      %458 = vmatpush.msra.mxu0 0.0
      %459 = vmatpush.msra.mxu0 0.0
      %460 = vmatpush.msra.mxu0 %v424
      %461 = vmatpush.msra.mxu0 %v404
      %462 = vmatpush.msra.mxu0 %v401
      %463 = vmatpush.msra.mxu0 %v398
      %464 = vmatpush.msra.mxu0 %v395
      %465 = vmatmul.f32.gmra.mxu0 %v417
      %v466 = vpop.f32.mrf.mxu0
      %v467 = vadd.f32 %v413, %v466
      %468 = vdwg.mxu0
      %469 = vmatpush.msra.mxu0 0.0
      %470 = vmatpush.msra.mxu0 0.0
      %471 = vmatpush.msra.mxu0 0.0
      %472 = vmatpush.msra.mxu0 0.0
      %473 = vmatpush.msra.mxu0 0.0
      %474 = vmatpush.msra.mxu0 0.0
      %475 = vmatpush.msra.mxu0 0.0
      %476 = vmatpush.msra.mxu0 0.0
      %477 = vmatpush.msra.mxu0 0.0
      %478 = vmatpush.msra.mxu0 0.0
      %479 = vmatpush.msra.mxu0 0.0
      %480 = vmatpush.msra.mxu0 %v427
      %481 = vmatpush.msra.mxu0 %v405
      %482 = vmatpush.msra.mxu0 %v402
      %483 = vmatpush.msra.mxu0 %v399
      %484 = vmatpush.msra.mxu0 %v396
      %485 = vmatmul.f32.gmra.mxu0 %v417
      %v486 = vpop.f32.mrf.mxu0
      %v487 = vadd.f32 %v413, %v486
      %488 = vdwg.mxu0
      %v489 = vld [vmem:[%s165] sm:$0xff]
      %v490 = vld [vmem:[%s165 + $0x8] sm:$0xf]
      %v491 = vxor.u32 %v447, 2147483648
      %v492 = vxor.u32 %v467, 2147483648
      %v493 = vxor.u32 %v487, 2147483648
      %v494 = vmul.f32 %v491, 1.442695
      %v495 = vpow.pop %v494
      %v496 = vmul.f32 %v492, 1.442695
      %v497 = vpow.pop %v496
      %v498 = vmul.f32 %v493, 1.442695
      %v499 = vpow.pop %v498
      %v500 = vadd.f32 %v495, 1.0
      %v501 = vadd.f32 %v497, 1.0
      %v502 = vadd.f32 %v499, 1.0
      %v503 = vrcp.pop %v500
      %v504 = vmul.f32 %v500, %v503
      %v505 = vsub.f32 1.0, %v504
      %v506 = vmul.f32 %v503, %v505
      %v507 = vadd.f32 %v503, %v506
      %vm508 = vweird.f32 %v500
      %vm509 = vweird.f32 %v503
      %vm510 = vmor %vm508, %vm509
      %v511 = vsel %vm510, %v503, %v507
      %v512 = vand.u32 2147483647, %v500
      %vm513 = vcmp.eq.f32.partialorder %v512, 8.507059e+37
      %v514 = vand.u32 %v500, 2147483648
      %v515 = vor.u32 1.1754944e-38, %v514
      %v516 = vsel %vm513, %v515, %v511
      %v517 = vmul.f32 1.0, %v516
      %v518 = vrcp.pop %v501
      %v519 = vmul.f32 %v501, %v518
      %v520 = vsub.f32 1.0, %v519
      %v521 = vmul.f32 %v518, %v520
      %v522 = vadd.f32 %v518, %v521
      %vm523 = vweird.f32 %v501
      %vm524 = vweird.f32 %v518
      %vm525 = vmor %vm523, %vm524
      %v526 = vsel %vm525, %v518, %v522
      %v527 = vand.u32 2147483647, %v501
      %vm528 = vcmp.eq.f32.partialorder %v527, 8.507059e+37
      %v529 = vand.u32 %v501, 2147483648
      %v530 = vor.u32 1.1754944e-38, %v529
      %v531 = vsel %vm528, %v530, %v526
      %v532 = vmul.f32 1.0, %v531
      %v533 = vrcp.pop %v502
      %v534 = vmul.f32 %v502, %v533
      %v535 = vsub.f32 1.0, %v534
      %v536 = vmul.f32 %v533, %v535
      %v537 = vadd.f32 %v533, %v536
      %vm538 = vweird.f32 %v502
      %vm539 = vweird.f32 %v533
      %vm540 = vmor %vm538, %vm539
      %v541 = vsel %vm540, %v533, %v537
      %v542 = vand.u32 2147483647, %v502
      %vm543 = vcmp.eq.f32.partialorder %v542, 8.507059e+37
      %v544 = vand.u32 %v502, 2147483648
      %v545 = vor.u32 1.1754944e-38, %v544
      %v546 = vsel %vm543, %v545, %v541
      %v547 = vmul.f32 1.0, %v546
      %v551 = vrot.slane %v517, 4
      %v552 = vrot.slane %v532, 4
      %v553 = vrot.slane %v547, 4
      %v557 = vmul.f32 %v447, %v551
      %v558 = vmul.f32 %v467, %v552
      %v559 = vmul.f32 %v487, %v553
      %v563 = vrot.slane %v558, 4
      %v564 = vsel %vm419, %v557, %v563
      %565 = vrot.lane.b32.xlu0 %v564, 19
      %v566 = vpop.permute.xlu0 %565
      %567 = vrot.lane.b32.xlu0 %v559, 19
      %v568 = vpop.permute.xlu0 %567
      %v569 = vrot.slane %v566, 4
      %vm570 = vcmask 154624
      %v571 = vsel %vm570, %v569, %v566
      %v572 = vsel %vm570, %v569, %v568
      %v575 = vadd.f32 %v489, %v571
      %v576 = vadd.f32 %v490, %v572
      %579 = vrot.lane.b32.xlu0 %v575, 109
      %v580 = vpop.permute.xlu0 %579
      %581 = vrot.lane.b32.xlu0 %v576, 109
      %v582 = vpop.permute.xlu0 %581
      %v583 = vrot.slane %v580, 4
      %v584 = vrot.slane %v582, 4
      %v585 = vsel %vm419, %v583, %v584
      %v586 = vsel %vm282, %v580, %v585
      %589 = vst [vmem:[%s170] sm:$0xff] %v586
      %590 = vst.msk [vmem:[%s170 + $0x8] sm:$0xf] %vm186, %v582
      %p591 = scmp.lt.s32.totalorder %s14, 1
      %s592 = scalar_select %p591, %s14, 1
      %s593 = smul.addr %s592, 3
      %s594 = smul.addr %s593, 4
      %s595 = scalar_lea.vmem %s3, %s594
      // Predicated region
      $region33: #{gres_block_forward.1} parent=31 // pred_check
        %p596 = pneg %p100
      $region34: #{gres_block_forward.1} parent=31 // pred_check_branch
        %598 = sbr.rel (%p596) target = $region36
      $region35: #{gres_block_forward.1} parent=31 // pred_region
        _
      $region36: #{gres_block_forward.1} parent=31 // pred_fallthru
        _
    $region32: #{gres_block_forward.1} parent=5 // pred_fallthru
      _
    %p599 = scmp.le.s32.totalorder 2, %s9
    // Predicated region
    $region37: #{gres_block_forward.1} parent=5 // pred_check
      %p600 = pneg %p599
    $region38: #{gres_block_forward.1} parent=5 // pred_check_branch
      %602 = sbr.rel (%p600) target = $region40
    $region39: #{gres_block_forward.1} parent=5 // pred_region
      %s603 = ssub.s32 %s9, 2
      // Predicated region
      $region41: #{gres_block_forward.1} parent=39 // pred_check
        %p604 = pneg %p106
      $region42: #{gres_block_forward.1} parent=39 // pred_check_branch
        %606 = sbr.rel (%p604) target = $region44
      $region43: #{gres_block_forward.1} parent=39 // pred_region
        %p607 = scmp.lt.s32.totalorder %s15, 1
        %s608 = scalar_select %p607, %s15, 1
        %s609 = smul.addr %s608, 3
        %s610 = smul.addr %s609, 4
        %s611 = scalar_lea.vmem %s3, %s610
      $region44: #{gres_block_forward.1} parent=39 // pred_fallthru
        _
    $region40: #{gres_block_forward.1} parent=5 // pred_fallthru
      _
  $region6: #{gres_block_forward.1} parent=0 // loop_footer
    %s13 = sadd.s32 1, %s9
  $region7: #{gres_block_forward.1} parent=0 // loop_footer_branch
    %8 = sbr.rel target = $region3
  $region8: #{gres_block_forward.1} parent=0 // loop_exit
    _

</llo_original>
